<compile_context>
chip_gen: v7x
topology: tpu7x:2x2x1
jax: 0.10.0
libtpu: 0.0.40
codegen_flags: <defaults>
</compile_context>

<pallas_src>
import jax
import jax.numpy as jnp
from jax.experimental import pallas as pl
from jax.experimental.pallas import tpu as pltpu


def _dueling_kernel(xT_ref,
                    w1_ref, b1_ref,
                    w2_ref, b2_ref,
                    w3_ref, b3_ref,
                    w4_ref, b4_ref,
                    out_ref):
    """One batch tile, transposed layout: out = [V; A] of shape (1+act, TILE_B)."""
    xT = xT_ref[...]                                                   # (S, TB)

    # layer_1 + ReLU : (64, S) @ (S, TB) -> (64, TB)
    h1 = jnp.dot(w1_ref[...], xT, preferred_element_type=jnp.float32) + b1_ref[...]
    h1 = jnp.maximum(h1, 0.0)

    # layer_2 + ReLU : (32, 64) @ (64, TB) -> (32, TB)
    h2 = jnp.dot(w2_ref[...], h1, preferred_element_type=jnp.float32) + b2_ref[...]
    h2 = jnp.maximum(h2, 0.0)

    # fused layer_3a|layer_3b + ReLU : (32, 32) @ (32, TB) -> (32, TB)
    #   rows 0:16 = value hidden, rows 16:32 = advantage hidden
    h3 = jnp.dot(w3_ref[...], h2, preferred_element_type=jnp.float32) + b3_ref[...]
    h3 = jnp.maximum(h3, 0.0)

    # fused block-diagonal layer_4a|layer_4b : (1+act, 32) @ (32, TB)
    #   row 0 = V, rows 1: = A
    va = jnp.dot(w4_ref[...], h3, preferred_element_type=jnp.float32) + b4_ref[...]
    out_ref[...] = va.astype(out_ref.dtype)


def _pack_kernel_params(p):
    """Transpose to (out, in) layout and fuse the value/advantage heads."""
    act = p["w4b"].shape[1]
    # block-diagonal head weight in (in=32, out=1+act) layout, then transpose.
    w4 = jnp.zeros((32, 1 + act), jnp.float32)
    w4 = w4.at[:16, 0:1].set(p["w4a"]).at[16:, 1:].set(p["w4b"])
    return dict(
        w1=p["w1"].T,                                             # (64, S)
        b1=p["b1"].T,                                             # (64, 1)
        w2=p["w2"].T,                                             # (32, 64)
        b2=p["b2"].T,                                             # (32, 1)
        w3=jnp.concatenate([p["w3a"], p["w3b"]], axis=1).T,       # (32, 32)
        b3=jnp.concatenate([p["b3a"], p["b3b"]], axis=1).T,       # (32, 1)
        w4=w4.T,                                                  # (1+act, 32)
        b4=jnp.concatenate([p["b4a"], p["b4b"]], axis=1).T,       # (1+act, 1)
    )


def dueling_forward(x, params, *, tile_b=512):
    """Dueling-network forward. x: (B, state_size) f32 -> (B, action_size) f32."""
    B, S = x.shape
    act = params["w4b"].shape[1]
    kp = _pack_kernel_params(params)

    # Batch tile: multiple of 128 lanes, capped so VMEM stays tiny even with
    # double buffering (512 rows f32 ~ 16 KiB per stream, fine for v7x 64 MiB).
    lane = 128
    tb = min(int(tile_b), pl.cdiv(B, lane) * lane)
    b_pad = pl.cdiv(B, tb) * tb
    n_tiles = b_pad // tb

    # Batch-on-lanes layout: pad batch, then transpose -> (S, b_pad).
    xT = jnp.pad(x.astype(jnp.float32), ((0, b_pad - B), (0, 0))).T

    def _const_spec(shape):
        return pl.BlockSpec(shape, lambda i: (0, 0))   # resident across grid

    param_order = ("w1", "b1", "w2", "b2", "w3", "b3", "w4", "b4")
    in_specs = [pl.BlockSpec((S, tb), lambda i: (0, i))] + [
        _const_spec(kp[name].shape) for name in param_order
    ]

    n_param_elems = sum(int(kp[name].size) for name in param_order)
    cost = pl.CostEstimate(
        flops=2 * b_pad * (S * 64 + 64 * 32 + 32 * 32 + 32 * (1 + act)),
        transcendentals=0,
        bytes_accessed=4 * (S * b_pad + (1 + act) * b_pad + n_param_elems),
    )

    va = pl.pallas_call(
        _dueling_kernel,
        out_shape=jax.ShapeDtypeStruct((1 + act, b_pad), jnp.float32),
        grid=(n_tiles,),
        in_specs=in_specs,
        out_specs=pl.BlockSpec((1 + act, tb), lambda i: (0, i)),
        compiler_params=pltpu.CompilerParams(
            dimension_semantics=("parallel",),      # megacore split on v7x
            vmem_limit_bytes=32 * 1024 * 1024,
        ),
        cost_estimate=cost,
    )(xT, *(kp[name] for name in param_order))

    # Finalize in the wrapper (tiny fused XLA epilogue): the global mean over
    # batch AND actions couples all batch tiles, so it cannot be finalized
    # inside a single-pass "parallel"-tiled kernel.
    V = va[0:1, :B]            # (1, B)
    A = va[1:, :B]             # (act, B)
    return (V + A - jnp.mean(A)).T   # (B, act)  == V + (A - torch.mean(A))


def init_params(key, state_size, action_size):
    """Deterministic synthetic parameter init (shapes match the nn.Linear layers).

    Weights are stored in (in, out) layout so y = x @ W + b  ==  nn.Linear(x).
    """
    sizes = {
        "1": (state_size, 64),
        "2": (64, 32),
        "3a": (32, 16),
        "3b": (32, 16),
        "4a": (16, 1),
        "4b": (16, action_size),
    }
    params = {}
    for name, (fan_in, fan_out) in sizes.items():
        key, kw, kb = jax.random.split(key, 3)
        bound = 1.0 / jnp.sqrt(fan_in)
        params[f"w{name}"] = jax.random.uniform(
            kw, (fan_in, fan_out), jnp.float32, -bound, bound)
        params[f"b{name}"] = jax.random.uniform(
            kb, (1, fan_out), jnp.float32, -bound, bound)
    return params


def reference_forward(x, p):
    """Pure-JAX reference matching the PyTorch module (unfused heads)."""
    h1 = jnp.maximum(x @ p["w1"] + p["b1"], 0.0)
    h2 = jnp.maximum(h1 @ p["w2"] + p["b2"], 0.0)
    ha = jnp.maximum(h2 @ p["w3a"] + p["b3a"], 0.0)
    hb = jnp.maximum(h2 @ p["w3b"] + p["b3b"], 0.0)
    V = ha @ p["w4a"] + p["b4a"]
    A = hb @ p["w4b"] + p["b4b"]
    A = A - jnp.mean(A)          # global mean over batch AND actions (torch.mean)
    return V + A


if __name__ == "__main__":
    state_size = 8
    action_size = 4
    batch = 2

    key = jax.random.PRNGKey(0)
    key, kx = jax.random.split(key)
    params = init_params(key, state_size, action_size)
    x = jax.random.normal(kx, (batch, state_size), jnp.float32)

    out = jax.block_until_ready(dueling_forward(x, params))
    ref = reference_forward(x, params)

    assert out.shape == (batch, action_size), out.shape
    assert jnp.allclose(out, ref, atol=1e-4, rtol=1e-4), (out, ref)

    print("KERNEL_OK")
</pallas_src>

<mosaic_0001>
module attributes {stable_mosaic.version = 11 : i64} {
  func.func @_dueling_kernel(%arg0: i32, %arg1: memref<8x128xf32, #tpu.memory_space<vmem>>, %arg2: memref<64x8xf32, #tpu.memory_space<vmem>>, %arg3: memref<64x1xf32, #tpu.memory_space<vmem>>, %arg4: memref<32x64xf32, #tpu.memory_space<vmem>>, %arg5: memref<32x1xf32, #tpu.memory_space<vmem>>, %arg6: memref<32x32xf32, #tpu.memory_space<vmem>>, %arg7: memref<32x1xf32, #tpu.memory_space<vmem>>, %arg8: memref<5x32xf32, #tpu.memory_space<vmem>>, %arg9: memref<5x1xf32, #tpu.memory_space<vmem>>, %arg10: memref<5x128xf32, #tpu.memory_space<vmem>>) attributes {dimension_semantics = [#tpu.dimension_semantics<parallel>], iteration_bounds = array<i64: 1>, scalar_prefetch = 0 : i64, scratch_operands = 0 : i64, tpu.core_type = #tpu.core_type<tc>, window_params = [{transform_indices = @transform_0, window_bounds = array<i64: 8, 128>}, {pipeline_mode = #tpu.pipeline_mode<synchronous>, transform_indices = @transform_1, window_bounds = array<i64: 64, 8>}, {pipeline_mode = #tpu.pipeline_mode<synchronous>, transform_indices = @transform_2, window_bounds = array<i64: 64, 1>}, {pipeline_mode = #tpu.pipeline_mode<synchronous>, transform_indices = @transform_3, window_bounds = array<i64: 32, 64>}, {pipeline_mode = #tpu.pipeline_mode<synchronous>, transform_indices = @transform_4, window_bounds = array<i64: 32, 1>}, {pipeline_mode = #tpu.pipeline_mode<synchronous>, transform_indices = @transform_5, window_bounds = array<i64: 32, 32>}, {pipeline_mode = #tpu.pipeline_mode<synchronous>, transform_indices = @transform_6, window_bounds = array<i64: 32, 1>}, {pipeline_mode = #tpu.pipeline_mode<synchronous>, transform_indices = @transform_7, window_bounds = array<i64: 5, 32>}, {pipeline_mode = #tpu.pipeline_mode<synchronous>, transform_indices = @transform_8, window_bounds = array<i64: 5, 1>}, {transform_indices = @transform_9, window_bounds = array<i64: 5, 128>}]} {
    %c0 = arith.constant 0 : index
    %c0_0 = arith.constant 0 : index
    %0 = vector.load %arg1[%c0, %c0_0] : memref<8x128xf32, #tpu.memory_space<vmem>>, vector<8x128xf32>
    %c0_1 = arith.constant 0 : index
    %c0_2 = arith.constant 0 : index
    %1 = vector.load %arg2[%c0_1, %c0_2] : memref<64x8xf32, #tpu.memory_space<vmem>>, vector<64x8xf32>
    %cst = arith.constant dense<0.000000e+00> : vector<64x128xf32>
    %2 = tpu.matmul %1, %0, %cst {dimension_numbers = #tpu.dot_dimension_numbers<[1], [0], [0], [1], [0, 0, 1, 1], [], []>} : vector<64x8xf32>, vector<8x128xf32>, vector<64x128xf32> -> vector<64x128xf32>
    %c0_3 = arith.constant 0 : index
    %c0_4 = arith.constant 0 : index
    %3 = vector.load %arg3[%c0_3, %c0_4] : memref<64x1xf32, #tpu.memory_space<vmem>>, vector<64x1xf32>
    %4 = vector.broadcast %3 : vector<64x1xf32> to vector<64x128xf32>
    %5 = arith.addf %2, %4 : vector<64x128xf32>
    %cst_5 = arith.constant 0.000000e+00 : f32
    %6 = vector.broadcast %cst_5 : f32 to vector<64x128xf32>
    %7 = arith.maximumf %5, %6 : vector<64x128xf32>
    %c0_6 = arith.constant 0 : index
    %c0_7 = arith.constant 0 : index
    %8 = vector.load %arg4[%c0_6, %c0_7] : memref<32x64xf32, #tpu.memory_space<vmem>>, vector<32x64xf32>
    %cst_8 = arith.constant dense<0.000000e+00> : vector<32x128xf32>
    %9 = tpu.matmul %8, %7, %cst_8 {dimension_numbers = #tpu.dot_dimension_numbers<[1], [0], [0], [1], [0, 0, 1, 1], [], []>} : vector<32x64xf32>, vector<64x128xf32>, vector<32x128xf32> -> vector<32x128xf32>
    %c0_9 = arith.constant 0 : index
    %c0_10 = arith.constant 0 : index
    %10 = vector.load %arg5[%c0_9, %c0_10] : memref<32x1xf32, #tpu.memory_space<vmem>>, vector<32x1xf32>
    %11 = vector.broadcast %10 : vector<32x1xf32> to vector<32x128xf32>
    %12 = arith.addf %9, %11 : vector<32x128xf32>
    %cst_11 = arith.constant 0.000000e+00 : f32
    %13 = vector.broadcast %cst_11 : f32 to vector<32x128xf32>
    %14 = arith.maximumf %12, %13 : vector<32x128xf32>
    %c0_12 = arith.constant 0 : index
    %c0_13 = arith.constant 0 : index
    %15 = vector.load %arg6[%c0_12, %c0_13] : memref<32x32xf32, #tpu.memory_space<vmem>>, vector<32x32xf32>
    %cst_14 = arith.constant dense<0.000000e+00> : vector<32x128xf32>
    %16 = tpu.matmul %15, %14, %cst_14 {dimension_numbers = #tpu.dot_dimension_numbers<[1], [0], [0], [1], [0, 0, 1, 1], [], []>} : vector<32x32xf32>, vector<32x128xf32>, vector<32x128xf32> -> vector<32x128xf32>
    %c0_15 = arith.constant 0 : index
    %c0_16 = arith.constant 0 : index
    %17 = vector.load %arg7[%c0_15, %c0_16] : memref<32x1xf32, #tpu.memory_space<vmem>>, vector<32x1xf32>
    %18 = vector.broadcast %17 : vector<32x1xf32> to vector<32x128xf32>
    %19 = arith.addf %16, %18 : vector<32x128xf32>
    %cst_17 = arith.constant 0.000000e+00 : f32
    %20 = vector.broadcast %cst_17 : f32 to vector<32x128xf32>
    %21 = arith.maximumf %19, %20 : vector<32x128xf32>
    %c0_18 = arith.constant 0 : index
    %c0_19 = arith.constant 0 : index
    %22 = vector.load %arg8[%c0_18, %c0_19] : memref<5x32xf32, #tpu.memory_space<vmem>>, vector<5x32xf32>
    %cst_20 = arith.constant dense<0.000000e+00> : vector<5x128xf32>
    %23 = tpu.matmul %22, %21, %cst_20 {dimension_numbers = #tpu.dot_dimension_numbers<[1], [0], [0], [1], [0, 0, 1, 1], [], []>} : vector<5x32xf32>, vector<32x128xf32>, vector<5x128xf32> -> vector<5x128xf32>
    %c0_21 = arith.constant 0 : index
    %c0_22 = arith.constant 0 : index
    %24 = vector.load %arg9[%c0_21, %c0_22] : memref<5x1xf32, #tpu.memory_space<vmem>>, vector<5x1xf32>
    %25 = vector.broadcast %24 : vector<5x1xf32> to vector<5x128xf32>
    %26 = arith.addf %23, %25 : vector<5x128xf32>
    %c0_23 = arith.constant 0 : index
    %c0_24 = arith.constant 0 : index
    %27 = vector.load %arg10[%c0_23, %c0_24] : memref<5x128xf32, #tpu.memory_space<vmem>>, vector<5x128xf32>
    tpu.vector_store %arg10[%c0_23, %c0_24], %26 {strides = array<i32>} : memref<5x128xf32, #tpu.memory_space<vmem>>, vector<5x128xf32>,
    return
  }
  func.func @transform_0(%arg0: i32) -> (i32, i32) {
    %c0_i32 = arith.constant 0 : i32
    %c0_i32_0 = arith.constant 0 : i32
    return %c0_i32, %arg0 : i32, i32
  }
  func.func @transform_1(%arg0: i32) -> (i32, i32) {
    %c0_i32 = arith.constant 0 : i32
    %c0_i32_0 = arith.constant 0 : i32
    %c0_i32_1 = arith.constant 0 : i32
    return %c0_i32, %c0_i32_0 : i32, i32
  }
  func.func @transform_2(%arg0: i32) -> (i32, i32) {
    %c0_i32 = arith.constant 0 : i32
    %c0_i32_0 = arith.constant 0 : i32
    %c0_i32_1 = arith.constant 0 : i32
    return %c0_i32, %c0_i32_0 : i32, i32
  }
  func.func @transform_3(%arg0: i32) -> (i32, i32) {
    %c0_i32 = arith.constant 0 : i32
    %c0_i32_0 = arith.constant 0 : i32
    %c0_i32_1 = arith.constant 0 : i32
    return %c0_i32, %c0_i32_0 : i32, i32
  }
  func.func @transform_4(%arg0: i32) -> (i32, i32) {
    %c0_i32 = arith.constant 0 : i32
    %c0_i32_0 = arith.constant 0 : i32
    %c0_i32_1 = arith.constant 0 : i32
    return %c0_i32, %c0_i32_0 : i32, i32
  }
  func.func @transform_5(%arg0: i32) -> (i32, i32) {
    %c0_i32 = arith.constant 0 : i32
    %c0_i32_0 = arith.constant 0 : i32
    %c0_i32_1 = arith.constant 0 : i32
    return %c0_i32, %c0_i32_0 : i32, i32
  }
  func.func @transform_6(%arg0: i32) -> (i32, i32) {
    %c0_i32 = arith.constant 0 : i32
    %c0_i32_0 = arith.constant 0 : i32
    %c0_i32_1 = arith.constant 0 : i32
    return %c0_i32, %c0_i32_0 : i32, i32
  }
  func.func @transform_7(%arg0: i32) -> (i32, i32) {
    %c0_i32 = arith.constant 0 : i32
    %c0_i32_0 = arith.constant 0 : i32
    %c0_i32_1 = arith.constant 0 : i32
    return %c0_i32, %c0_i32_0 : i32, i32
  }
  func.func @transform_8(%arg0: i32) -> (i32, i32) {
    %c0_i32 = arith.constant 0 : i32
    %c0_i32_0 = arith.constant 0 : i32
    %c0_i32_1 = arith.constant 0 : i32
    return %c0_i32, %c0_i32_0 : i32, i32
  }
  func.func @transform_9(%arg0: i32) -> (i32, i32) {
    %c0_i32 = arith.constant 0 : i32
    %c0_i32_0 = arith.constant 0 : i32
    return %c0_i32, %arg0 : i32, i32
  }
}

</mosaic_0001>

<llo_original>
// kernel: tpu_custom_call.1
$region0: #{tpu_custom_call.1}
  #allocation0 [shape = 'u32[]', space=smem, size = 0x4, offset = 0x4, fixed_abs, tag = 'smem constant byte address 0x4 - core index']
  #allocation1 [shape = 'u32[144,128]{1,0:T(1,128)}', space=vmem, size = 0x12000, scoped, tag = 'internal scratch']
  %s0 = inlined_call_operand.vmem [shape: f32[8,128], index: 0, kind: input, shape index: {}]
  %s1 = inlined_call_operand.vmem [shape: f32[64,8], index: 1, kind: input, shape index: {}]
  %s2 = inlined_call_operand.vmem [shape: f32[64,1], index: 2, kind: input, shape index: {}]
  %s3 = inlined_call_operand.vmem [shape: f32[32,64], index: 3, kind: input, shape index: {}]
  %s4 = inlined_call_operand.vmem [shape: f32[32,1], index: 4, kind: input, shape index: {}]
  %s5 = inlined_call_operand.vmem [shape: f32[32,32], index: 5, kind: input, shape index: {}]
  %s6 = inlined_call_operand.vmem [shape: f32[32,1], index: 6, kind: input, shape index: {}]
  %s7 = inlined_call_operand.vmem [shape: f32[5,32], index: 7, kind: input, shape index: {}]
  %s8 = inlined_call_operand.vmem [shape: f32[5,1], index: 8, kind: input, shape index: {}]
  %s9 = inlined_call_operand.hbm [shape: f32[5,128], index: 9, kind: output, shape index: {}]
  %s10 = sld [smem:[#allocation0]]
  $region46: #{tpu_custom_call.1} parent=0
    _
  %s12 = ssub.s32 1, %s10
  %s13 = scalar_select 0, %s12, %s10
  $region1: #{tpu_custom_call.1} parent=0
    #allocation2 [shape = 'u8[4096]{0}', space=vmem, size = 0x1000, scoped, tag = 'output window, operand 0, single buffered']
    #allocation3 [shape = 's32[1]{0}', space=sflag, size = 0x4, scoped, tag = 'scoped memory for tpu_custom_call.1']
    %14 = vsyncpa [#allocation3], 0
    // Predicated region
    $region2: #{tpu_custom_call.1} parent=1 // pred_check
      _
    $region3: #{tpu_custom_call.1} parent=1 // pred_check_branch
      %16 = sbr.rel (0) target = $region5
    $region4: #{tpu_custom_call.1} parent=1 // pred_region
      _
    $region5: #{tpu_custom_call.1} parent=1 // pred_fallthru
      _
    // Predicated region
    $region6: #{tpu_custom_call.1} parent=1 // pred_check
      _
    $region7: #{tpu_custom_call.1} parent=1 // pred_check_branch
      %18 = sbr.rel (0) target = $region9
    $region8: #{tpu_custom_call.1} parent=1 // pred_region
      _
    $region9: #{tpu_custom_call.1} parent=1 // pred_fallthru
      _
    // Predicated region
    $region10: #{tpu_custom_call.1} parent=1 // pred_check
      _
    $region11: #{tpu_custom_call.1} parent=1 // pred_check_branch
      %20 = sbr.rel (0) target = $region13
    $region12: #{tpu_custom_call.1} parent=1 // pred_region
      _
    $region13: #{tpu_custom_call.1} parent=1 // pred_fallthru
      _
    // Predicated region
    $region14: #{tpu_custom_call.1} parent=1 // pred_check
      _
    $region15: #{tpu_custom_call.1} parent=1 // pred_check_branch
      %22 = sbr.rel (0) target = $region17
    $region16: #{tpu_custom_call.1} parent=1 // pred_region
      _
    $region17: #{tpu_custom_call.1} parent=1 // pred_fallthru
      _
    // Predicated region
    $region18: #{tpu_custom_call.1} parent=1 // pred_check
      _
    $region19: #{tpu_custom_call.1} parent=1 // pred_check_branch
      %24 = sbr.rel (0) target = $region21
    $region20: #{tpu_custom_call.1} parent=1 // pred_region
      _
    $region21: #{tpu_custom_call.1} parent=1 // pred_fallthru
      _
    // Predicated region
    $region22: #{tpu_custom_call.1} parent=1 // pred_check
      _
    $region23: #{tpu_custom_call.1} parent=1 // pred_check_branch
      %26 = sbr.rel (0) target = $region25
    $region24: #{tpu_custom_call.1} parent=1 // pred_region
      _
    $region25: #{tpu_custom_call.1} parent=1 // pred_fallthru
      _
    // Predicated region
    $region26: #{tpu_custom_call.1} parent=1 // pred_check
      _
    $region27: #{tpu_custom_call.1} parent=1 // pred_check_branch
      %28 = sbr.rel (0) target = $region29
    $region28: #{tpu_custom_call.1} parent=1 // pred_region
      _
    $region29: #{tpu_custom_call.1} parent=1 // pred_fallthru
      _
    // Predicated region
    $region30: #{tpu_custom_call.1} parent=1 // pred_check
      _
    $region31: #{tpu_custom_call.1} parent=1 // pred_check_branch
      %30 = sbr.rel (0) target = $region33
    $region32: #{tpu_custom_call.1} parent=1 // pred_region
      _
    $region33: #{tpu_custom_call.1} parent=1 // pred_fallthru
      _
    // Predicated region
    $region34: #{tpu_custom_call.1} parent=1 // pred_check
      _
    $region35: #{tpu_custom_call.1} parent=1 // pred_check_branch
      %32 = sbr.rel (0) target = $region37
    $region36: #{tpu_custom_call.1} parent=1 // pred_region
      _
    $region37: #{tpu_custom_call.1} parent=1 // pred_fallthru
      _
    %v33 = vld [vmem:[%s0] sm:$0xff]
    %v34 = vld [vmem:[%s1] sm:$0xff]
    %v35 = vld [vmem:[%s1 + $0x8] sm:$0xff]
    %v36 = vld [vmem:[%s1 + $0x10] sm:$0xff]
    %v37 = vld [vmem:[%s1 + $0x18] sm:$0xff]
    %v38 = vld [vmem:[%s1 + $0x20] sm:$0xff]
    %v39 = vld [vmem:[%s1 + $0x28] sm:$0xff]
    %v40 = vld [vmem:[%s1 + $0x30] sm:$0xff]
    %v41 = vld [vmem:[%s1 + $0x38] sm:$0xff]
    %v42 = vld [vmem:[%s2] sm:$0xff]
    %v43 = vld [vmem:[%s2 + $0x8] sm:$0xff]
    %v44 = vld [vmem:[%s2 + $0x10] sm:$0xff]
    %v45 = vld [vmem:[%s2 + $0x18] sm:$0xff]
    %v46 = vld [vmem:[%s2 + $0x20] sm:$0xff]
    %v47 = vld [vmem:[%s2 + $0x28] sm:$0xff]
    %v48 = vld [vmem:[%s2 + $0x30] sm:$0xff]
    %v49 = vld [vmem:[%s2 + $0x38] sm:$0xff]
    %51 = vset.pattern.permute.xlu0 0
    %52 = vperm.xlu0 %51, %v42
    %v53 = vpop.permute.xlu0 %52
    %56 = vset.pattern.permute.xlu0 0
    %57 = vperm.xlu0 %56, %v43
    %v58 = vpop.permute.xlu0 %57
    %61 = vset.pattern.permute.xlu0 0
    %62 = vperm.xlu0 %61, %v44
    %v63 = vpop.permute.xlu0 %62
    %66 = vset.pattern.permute.xlu0 0
    %67 = vperm.xlu0 %66, %v45
    %v68 = vpop.permute.xlu0 %67
    %71 = vset.pattern.permute.xlu0 0
    %72 = vperm.xlu0 %71, %v46
    %v73 = vpop.permute.xlu0 %72
    %76 = vset.pattern.permute.xlu0 0
    %77 = vperm.xlu0 %76, %v47
    %v78 = vpop.permute.xlu0 %77
    %81 = vset.pattern.permute.xlu0 0
    %82 = vperm.xlu0 %81, %v48
    %v83 = vpop.permute.xlu0 %82
    %86 = vset.pattern.permute.xlu0 0
    %87 = vperm.xlu0 %86, %v49
    %v88 = vpop.permute.xlu0 %87
    %vm90 = vcmask 64512
    %v92 = vsel %vm90, %v34, 0
    %v95 = vsel %vm90, %v35, 0
    %v98 = vsel %vm90, %v36, 0
    %v101 = vsel %vm90, %v37, 0
    %v104 = vsel %vm90, %v38, 0
    %v107 = vsel %vm90, %v39, 0
    %v110 = vsel %vm90, %v40, 0
    %v113 = vsel %vm90, %v41, 0
    %115 = vmatprep.subr.mxu0 0.0
    %116 = vmatpush1.msra.mxu0 %v33
    %117 = vmatprep.subr.mxu0 0.0
    %118 = vmatpush1.msra.mxu0 0.0
    %119 = vmatprep.subr.mxu0 0.0
    %120 = vmatpush1.msra.mxu0 0.0
    %121 = vmatprep.subr.mxu0 0.0
    %122 = vmatpush1.msra.mxu0 0.0
    %123 = vmatprep.subr.mxu0 0.0
    %124 = vmatpush1.msra.mxu0 0.0
    %125 = vmatprep.subr.mxu0 0.0
    %126 = vmatpush1.msra.mxu0 0.0
    %127 = vmatprep.subr.mxu0 0.0
    %128 = vmatpush1.msra.mxu0 0.0
    %129 = vmatprep.subr.mxu0 0.0
    %130 = vmatpush1.msra.mxu0 0.0
    %131 = vmatprep.subr.mxu0 0.0
    %132 = vmatpush1.msra.mxu0 0.0
    %133 = vmatprep.subr.mxu0 0.0
    %134 = vmatpush1.msra.mxu0 0.0
    %135 = vmatprep.subr.mxu0 0.0
    %136 = vmatpush1.msra.mxu0 0.0
    %137 = vmatprep.subr.mxu0 0.0
    %138 = vmatpush1.msra.mxu0 0.0
    %139 = vmatprep.subr.mxu0 0.0
    %140 = vmatpush1.msra.mxu0 0.0
    %141 = vmatprep.subr.mxu0 0.0
    %142 = vmatpush1.msra.mxu0 0.0
    %143 = vmatprep.subr.mxu0 0.0
    %144 = vmatpush1.msra.mxu0 0.0
    %145 = vmatprep.subr.mxu0 0.0
    %146 = vmatpush1.msra.mxu0 0.0
    %147 = vmatprep.subr.mxu0 0.0
    %148 = vmatpush1.msra.mxu0 0.0
    %149 = vmatprep.subr.mxu0 0.0
    %150 = vmatpush1.msra.mxu0 0.0
    %151 = vmatprep.subr.mxu0 0.0
    %152 = vmatpush1.msra.mxu0 0.0
    %153 = vmatprep.subr.mxu0 0.0
    %154 = vmatpush1.msra.mxu0 0.0
    %155 = vmatprep.subr.mxu0 0.0
    %156 = vmatpush1.msra.mxu0 0.0
    %157 = vmatprep.subr.mxu0 0.0
    %158 = vmatpush1.msra.mxu0 0.0
    %159 = vmatprep.subr.mxu0 0.0
    %160 = vmatpush1.msra.mxu0 0.0
    %161 = vmatprep.subr.mxu0 0.0
    %162 = vmatpush1.msra.mxu0 0.0
    %163 = vmatprep.subr.mxu0 0.0
    %164 = vmatpush1.msra.mxu0 0.0
    %165 = vmatprep.subr.mxu0 0.0
    %166 = vmatpush1.msra.mxu0 0.0
    %167 = vmatprep.subr.mxu0 0.0
    %168 = vmatpush1.msra.mxu0 0.0
    %169 = vmatprep.subr.mxu0 0.0
    %170 = vmatpush1.msra.mxu0 0.0
    %171 = vmatprep.subr.mxu0 0.0
    %172 = vmatpush1.msra.mxu0 0.0
    %173 = vmatprep.subr.mxu0 0.0
    %174 = vmatpush1.msra.mxu0 0.0
    %175 = vmatprep.subr.mxu0 0.0
    %176 = vmatpush1.msra.mxu0 0.0
    %177 = vmatprep.subr.mxu0 0.0
    %178 = vmatpush1.msra.mxu0 0.0
    %179 = vmatprep.mubr.f32.mxu0 0.0
    %180 = vmatmul.mubr.f32.gmra.mrb[0].mxu0 %v92
    %v181 = vpop.f32.mrb[0].mxu0
    %v182 = vadd.f32 %v53, %v181
    %v183 = vpop.f32.mrb[0].mxu0
    %184 = vmatprep.mubr.f32.mxu0 0.0
    %185 = vmatmul.mubr.f32.gmra.mrb[0].mxu0 %v95
    %v186 = vpop.f32.mrb[0].mxu0
    %v187 = vadd.f32 %v58, %v186
    %v188 = vpop.f32.mrb[0].mxu0
    %189 = vmatprep.mubr.f32.mxu0 0.0
    %190 = vmatmul.mubr.f32.gmra.mrb[0].mxu0 %v98
    %v191 = vpop.f32.mrb[0].mxu0
    %v192 = vadd.f32 %v63, %v191
    %v193 = vpop.f32.mrb[0].mxu0
    %194 = vmatprep.mubr.f32.mxu0 0.0
    %195 = vmatmul.mubr.f32.gmra.mrb[0].mxu0 %v101
    %v196 = vpop.f32.mrb[0].mxu0
    %v197 = vadd.f32 %v68, %v196
    %v198 = vpop.f32.mrb[0].mxu0
    %199 = vmatprep.mubr.f32.mxu0 0.0
    %200 = vmatmul.mubr.f32.gmra.mrb[0].mxu0 %v104
    %v201 = vpop.f32.mrb[0].mxu0
    %v202 = vadd.f32 %v73, %v201
    %v203 = vpop.f32.mrb[0].mxu0
    %204 = vmatprep.mubr.f32.mxu0 0.0
    %205 = vmatmul.mubr.f32.gmra.mrb[0].mxu0 %v107
    %v206 = vpop.f32.mrb[0].mxu0
    %v207 = vadd.f32 %v78, %v206
    %v208 = vpop.f32.mrb[0].mxu0
    %209 = vmatprep.mubr.f32.mxu0 0.0
    %210 = vmatmul.mubr.f32.gmra.mrb[0].mxu0 %v110
    %v211 = vpop.f32.mrb[0].mxu0
    %v212 = vadd.f32 %v83, %v211
    %v213 = vpop.f32.mrb[0].mxu0
    %214 = vmatprep.mubr.f32.mxu0 0.0
    %215 = vmatmul.mubr.f32.gmra.mrb[0].mxu0 %v113
    %v216 = vpop.f32.mrb[0].mxu0
    %v217 = vadd.f32 %v88, %v216
    %v218 = vpop.f32.mrb[0].mxu0
    %219 = vdwg.mxu0
    %v220 = vmax.f32 %v182, 0.0
    %v221 = vmax.f32 %v187, 0.0
    %v222 = vmax.f32 %v192, 0.0
    %v223 = vmax.f32 %v197, 0.0
    %v224 = vmax.f32 %v202, 0.0
    %v225 = vmax.f32 %v207, 0.0
    %v226 = vmax.f32 %v212, 0.0
    %v227 = vmax.f32 %v217, 0.0
    %v228 = vld [vmem:[%s3] sm:$0xff]
    %v229 = vld [vmem:[%s3 + $0x8] sm:$0xff]
    %v230 = vld [vmem:[%s3 + $0x10] sm:$0xff]
    %v231 = vld [vmem:[%s3 + $0x18] sm:$0xff]
    %v232 = vld [vmem:[%s4] sm:$0xff]
    %v233 = vld [vmem:[%s4 + $0x8] sm:$0xff]
    %v234 = vld [vmem:[%s4 + $0x10] sm:$0xff]
    %v235 = vld [vmem:[%s4 + $0x18] sm:$0xff]
    %237 = vset.pattern.permute.xlu0 0
    %238 = vperm.xlu0 %237, %v232
    %v239 = vpop.permute.xlu0 %238
    %242 = vset.pattern.permute.xlu0 0
    %243 = vperm.xlu0 %242, %v233
    %v244 = vpop.permute.xlu0 %243
    %247 = vset.pattern.permute.xlu0 0
    %248 = vperm.xlu0 %247, %v234
    %v249 = vpop.permute.xlu0 %248
    %252 = vset.pattern.permute.xlu0 0
    %253 = vperm.xlu0 %252, %v235
    %v254 = vpop.permute.xlu0 %253
    %vm256 = vcmask 523264
    %v258 = vsel %vm256, %v228, 0
    %v261 = vsel %vm256, %v229, 0
    %v264 = vsel %vm256, %v230, 0
    %v267 = vsel %vm256, %v231, 0
    %269 = vmatprep.subr.mxu0 0.0
    %270 = vmatpush1.msra.mxu0 %v220
    %271 = vmatprep.subr.mxu0 0.0
    %272 = vmatpush1.msra.mxu0 %v221
    %273 = vmatprep.subr.mxu0 0.0
    %274 = vmatpush1.msra.mxu0 %v222
    %275 = vmatprep.subr.mxu0 0.0
    %276 = vmatpush1.msra.mxu0 %v223
    %277 = vmatprep.subr.mxu0 0.0
    %278 = vmatpush1.msra.mxu0 %v224
    %279 = vmatprep.subr.mxu0 0.0
    %280 = vmatpush1.msra.mxu0 %v225
    %281 = vmatprep.subr.mxu0 0.0
    %282 = vmatpush1.msra.mxu0 %v226
    %283 = vmatprep.subr.mxu0 0.0
    %284 = vmatpush1.msra.mxu0 %v227
    %285 = vmatprep.subr.mxu0 0.0
    %286 = vmatpush1.msra.mxu0 0.0
    %287 = vmatprep.subr.mxu0 0.0
    %288 = vmatpush1.msra.mxu0 0.0
    %289 = vmatprep.subr.mxu0 0.0
    %290 = vmatpush1.msra.mxu0 0.0
    %291 = vmatprep.subr.mxu0 0.0
    %292 = vmatpush1.msra.mxu0 0.0
    %293 = vmatprep.subr.mxu0 0.0
    %294 = vmatpush1.msra.mxu0 0.0
    %295 = vmatprep.subr.mxu0 0.0
    %296 = vmatpush1.msra.mxu0 0.0
    %297 = vmatprep.subr.mxu0 0.0
    %298 = vmatpush1.msra.mxu0 0.0
    %299 = vmatprep.subr.mxu0 0.0
    %300 = vmatpush1.msra.mxu0 0.0
    %301 = vmatprep.subr.mxu0 0.0
    %302 = vmatpush1.msra.mxu0 0.0
    %303 = vmatprep.subr.mxu0 0.0
    %304 = vmatpush1.msra.mxu0 0.0
    %305 = vmatprep.subr.mxu0 0.0
    %306 = vmatpush1.msra.mxu0 0.0
    %307 = vmatprep.subr.mxu0 0.0
    %308 = vmatpush1.msra.mxu0 0.0
    %309 = vmatprep.subr.mxu0 0.0
    %310 = vmatpush1.msra.mxu0 0.0
    %311 = vmatprep.subr.mxu0 0.0
    %312 = vmatpush1.msra.mxu0 0.0
    %313 = vmatprep.subr.mxu0 0.0
    %314 = vmatpush1.msra.mxu0 0.0
    %315 = vmatprep.subr.mxu0 0.0
    %316 = vmatpush1.msra.mxu0 0.0
    %317 = vmatprep.subr.mxu0 0.0
    %318 = vmatpush1.msra.mxu0 0.0
    %319 = vmatprep.subr.mxu0 0.0
    %320 = vmatpush1.msra.mxu0 0.0
    %321 = vmatprep.subr.mxu0 0.0
    %322 = vmatpush1.msra.mxu0 0.0
    %323 = vmatprep.subr.mxu0 0.0
    %324 = vmatpush1.msra.mxu0 0.0
    %325 = vmatprep.subr.mxu0 0.0
    %326 = vmatpush1.msra.mxu0 0.0
    %327 = vmatprep.subr.mxu0 0.0
    %328 = vmatpush1.msra.mxu0 0.0
    %329 = vmatprep.subr.mxu0 0.0
    %330 = vmatpush1.msra.mxu0 0.0
    %331 = vmatprep.subr.mxu0 0.0
    %332 = vmatpush1.msra.mxu0 0.0
    %333 = vmatprep.mubr.f32.mxu0 0.0
    %334 = vmatmul.mubr.f32.gmra.mrb[0].mxu0 %v258
    %v335 = vpop.f32.mrb[0].mxu0
    %v336 = vadd.f32 %v239, %v335
    %v337 = vpop.f32.mrb[0].mxu0
    %338 = vmatprep.mubr.f32.mxu0 0.0
    %339 = vmatmul.mubr.f32.gmra.mrb[0].mxu0 %v261
    %v340 = vpop.f32.mrb[0].mxu0
    %v341 = vadd.f32 %v244, %v340
    %v342 = vpop.f32.mrb[0].mxu0
    %343 = vmatprep.mubr.f32.mxu0 0.0
    %344 = vmatmul.mubr.f32.gmra.mrb[0].mxu0 %v264
    %v345 = vpop.f32.mrb[0].mxu0
    %v346 = vadd.f32 %v249, %v345
    %v347 = vpop.f32.mrb[0].mxu0
    %348 = vmatprep.mubr.f32.mxu0 0.0
    %349 = vmatmul.mubr.f32.gmra.mrb[0].mxu0 %v267
    %v350 = vpop.f32.mrb[0].mxu0
    %v351 = vadd.f32 %v254, %v350
    %v352 = vpop.f32.mrb[0].mxu0
    %353 = vdwg.mxu0
    %v354 = vmax.f32 %v336, 0.0
    %v355 = vmax.f32 %v341, 0.0
    %v356 = vmax.f32 %v346, 0.0
    %v357 = vmax.f32 %v351, 0.0
    %v358 = vld [vmem:[%s5] sm:$0xff]
    %v359 = vld [vmem:[%s5 + $0x8] sm:$0xff]
    %v360 = vld [vmem:[%s5 + $0x10] sm:$0xff]
    %v361 = vld [vmem:[%s5 + $0x18] sm:$0xff]
    %v362 = vld [vmem:[%s6] sm:$0xff]
    %v363 = vld [vmem:[%s6 + $0x8] sm:$0xff]
    %v364 = vld [vmem:[%s6 + $0x10] sm:$0xff]
    %v365 = vld [vmem:[%s6 + $0x18] sm:$0xff]
    %367 = vset.pattern.permute.xlu0 0
    %368 = vperm.xlu0 %367, %v362
    %v369 = vpop.permute.xlu0 %368
    %372 = vset.pattern.permute.xlu0 0
    %373 = vperm.xlu0 %372, %v363
    %v374 = vpop.permute.xlu0 %373
    %377 = vset.pattern.permute.xlu0 0
    %378 = vperm.xlu0 %377, %v364
    %v379 = vpop.permute.xlu0 %378
    %382 = vset.pattern.permute.xlu0 0
    %383 = vperm.xlu0 %382, %v365
    %v384 = vpop.permute.xlu0 %383
    %vm386 = vcmask 261120
    %v388 = vsel %vm386, %v358, 0
    %v391 = vsel %vm386, %v359, 0
    %v394 = vsel %vm386, %v360, 0
    %v397 = vsel %vm386, %v361, 0
    %399 = vmatprep.subr.mxu0 0.0
    %400 = vmatpush1.msra.mxu0 %v354
    %401 = vmatprep.subr.mxu0 0.0
    %402 = vmatpush1.msra.mxu0 %v355
    %403 = vmatprep.subr.mxu0 0.0
    %404 = vmatpush1.msra.mxu0 %v356
    %405 = vmatprep.subr.mxu0 0.0
    %406 = vmatpush1.msra.mxu0 %v357
    %407 = vmatprep.subr.mxu0 0.0
    %408 = vmatpush1.msra.mxu0 0.0
    %409 = vmatprep.subr.mxu0 0.0
    %410 = vmatpush1.msra.mxu0 0.0
    %411 = vmatprep.subr.mxu0 0.0
    %412 = vmatpush1.msra.mxu0 0.0
    %413 = vmatprep.subr.mxu0 0.0
    %414 = vmatpush1.msra.mxu0 0.0
    %415 = vmatprep.subr.mxu0 0.0
    %416 = vmatpush1.msra.mxu0 0.0
    %417 = vmatprep.subr.mxu0 0.0
    %418 = vmatpush1.msra.mxu0 0.0
    %419 = vmatprep.subr.mxu0 0.0
    %420 = vmatpush1.msra.mxu0 0.0
    %421 = vmatprep.subr.mxu0 0.0
    %422 = vmatpush1.msra.mxu0 0.0
    %423 = vmatprep.subr.mxu0 0.0
    %424 = vmatpush1.msra.mxu0 0.0
    %425 = vmatprep.subr.mxu0 0.0
    %426 = vmatpush1.msra.mxu0 0.0
    %427 = vmatprep.subr.mxu0 0.0
    %428 = vmatpush1.msra.mxu0 0.0
    %429 = vmatprep.subr.mxu0 0.0
    %430 = vmatpush1.msra.mxu0 0.0
    %431 = vmatprep.subr.mxu0 0.0
    %432 = vmatpush1.msra.mxu0 0.0
    %433 = vmatprep.subr.mxu0 0.0
    %434 = vmatpush1.msra.mxu0 0.0
    %435 = vmatprep.subr.mxu0 0.0
    %436 = vmatpush1.msra.mxu0 0.0
    %437 = vmatprep.subr.mxu0 0.0
    %438 = vmatpush1.msra.mxu0 0.0
    %439 = vmatprep.subr.mxu0 0.0
    %440 = vmatpush1.msra.mxu0 0.0
    %441 = vmatprep.subr.mxu0 0.0
    %442 = vmatpush1.msra.mxu0 0.0
    %443 = vmatprep.subr.mxu0 0.0
    %444 = vmatpush1.msra.mxu0 0.0
    %445 = vmatprep.subr.mxu0 0.0
    %446 = vmatpush1.msra.mxu0 0.0
    %447 = vmatprep.subr.mxu0 0.0
    %448 = vmatpush1.msra.mxu0 0.0
    %449 = vmatprep.subr.mxu0 0.0
    %450 = vmatpush1.msra.mxu0 0.0
    %451 = vmatprep.subr.mxu0 0.0
    %452 = vmatpush1.msra.mxu0 0.0
    %453 = vmatprep.subr.mxu0 0.0
    %454 = vmatpush1.msra.mxu0 0.0
    %455 = vmatprep.subr.mxu0 0.0
    %456 = vmatpush1.msra.mxu0 0.0
    %457 = vmatprep.subr.mxu0 0.0
    %458 = vmatpush1.msra.mxu0 0.0
    %459 = vmatprep.subr.mxu0 0.0
    %460 = vmatpush1.msra.mxu0 0.0
    %461 = vmatprep.subr.mxu0 0.0
    %462 = vmatpush1.msra.mxu0 0.0
    %463 = vmatprep.mubr.f32.mxu0 0.0
    %464 = vmatmul.mubr.f32.gmra.mrb[0].mxu0 %v388
    %v465 = vpop.f32.mrb[0].mxu0
    %v466 = vadd.f32 %v369, %v465
    %v467 = vpop.f32.mrb[0].mxu0
    %468 = vmatprep.mubr.f32.mxu0 0.0
    %469 = vmatmul.mubr.f32.gmra.mrb[0].mxu0 %v391
    %v470 = vpop.f32.mrb[0].mxu0
    %v471 = vadd.f32 %v374, %v470
    %v472 = vpop.f32.mrb[0].mxu0
    %473 = vmatprep.mubr.f32.mxu0 0.0
    %474 = vmatmul.mubr.f32.gmra.mrb[0].mxu0 %v394
    %v475 = vpop.f32.mrb[0].mxu0
    %v476 = vadd.f32 %v379, %v475
    %v477 = vpop.f32.mrb[0].mxu0
    %478 = vmatprep.mubr.f32.mxu0 0.0
    %479 = vmatmul.mubr.f32.gmra.mrb[0].mxu0 %v397
    %v480 = vpop.f32.mrb[0].mxu0
    %v481 = vadd.f32 %v384, %v480
    %v482 = vpop.f32.mrb[0].mxu0
    %483 = vdwg.mxu0
    %v484 = vmax.f32 %v466, 0.0
    %v485 = vmax.f32 %v471, 0.0
    %v486 = vmax.f32 %v476, 0.0
    %v487 = vmax.f32 %v481, 0.0
    %v488 = vld [vmem:[%s7] sm:$0x1f]
    %v489 = vld [vmem:[%s8] sm:$0x1f]
    %491 = vset.pattern.permute.xlu0 0
    %492 = vperm.xlu0 %491, %v489
    %v493 = vpop.permute.xlu0 %492
    %v496 = vsel %vm386, %v488, 0
    %498 = vmatprep.subr.mxu0 0.0
    %499 = vmatpush1.msra.mxu0 %v484
    %500 = vmatprep.subr.mxu0 0.0
    %501 = vmatpush1.msra.mxu0 %v485
    %502 = vmatprep.subr.mxu0 0.0
    %503 = vmatpush1.msra.mxu0 %v486
    %504 = vmatprep.subr.mxu0 0.0
    %505 = vmatpush1.msra.mxu0 %v487
    %506 = vmatprep.subr.mxu0 0.0
    %507 = vmatpush1.msra.mxu0 0.0
    %508 = vmatprep.subr.mxu0 0.0
    %509 = vmatpush1.msra.mxu0 0.0
    %510 = vmatprep.subr.mxu0 0.0
    %511 = vmatpush1.msra.mxu0 0.0
    %512 = vmatprep.subr.mxu0 0.0
    %513 = vmatpush1.msra.mxu0 0.0
    %514 = vmatprep.subr.mxu0 0.0
    %515 = vmatpush1.msra.mxu0 0.0
    %516 = vmatprep.subr.mxu0 0.0
    %517 = vmatpush1.msra.mxu0 0.0
    %518 = vmatprep.subr.mxu0 0.0
    %519 = vmatpush1.msra.mxu0 0.0
    %520 = vmatprep.subr.mxu0 0.0
    %521 = vmatpush1.msra.mxu0 0.0
    %522 = vmatprep.subr.mxu0 0.0
    %523 = vmatpush1.msra.mxu0 0.0
    %524 = vmatprep.subr.mxu0 0.0
    %525 = vmatpush1.msra.mxu0 0.0
    %526 = vmatprep.subr.mxu0 0.0
    %527 = vmatpush1.msra.mxu0 0.0
    %528 = vmatprep.subr.mxu0 0.0
    %529 = vmatpush1.msra.mxu0 0.0
    %530 = vmatprep.subr.mxu0 0.0
    %531 = vmatpush1.msra.mxu0 0.0
    %532 = vmatprep.subr.mxu0 0.0
    %533 = vmatpush1.msra.mxu0 0.0
    %534 = vmatprep.subr.mxu0 0.0
    %535 = vmatpush1.msra.mxu0 0.0
    %536 = vmatprep.subr.mxu0 0.0
    %537 = vmatpush1.msra.mxu0 0.0
    %538 = vmatprep.subr.mxu0 0.0
    %539 = vmatpush1.msra.mxu0 0.0
    %540 = vmatprep.subr.mxu0 0.0
    %541 = vmatpush1.msra.mxu0 0.0
    %542 = vmatprep.subr.mxu0 0.0
    %543 = vmatpush1.msra.mxu0 0.0
    %544 = vmatprep.subr.mxu0 0.0
    %545 = vmatpush1.msra.mxu0 0.0
    %546 = vmatprep.subr.mxu0 0.0
    %547 = vmatpush1.msra.mxu0 0.0
    %548 = vmatprep.subr.mxu0 0.0
    %549 = vmatpush1.msra.mxu0 0.0
    %550 = vmatprep.subr.mxu0 0.0
    %551 = vmatpush1.msra.mxu0 0.0
    %552 = vmatprep.subr.mxu0 0.0
    %553 = vmatpush1.msra.mxu0 0.0
    %554 = vmatprep.subr.mxu0 0.0
    %555 = vmatpush1.msra.mxu0 0.0
    %556 = vmatprep.subr.mxu0 0.0
    %557 = vmatpush1.msra.mxu0 0.0
    %558 = vmatprep.subr.mxu0 0.0
    %559 = vmatpush1.msra.mxu0 0.0
    %560 = vmatprep.subr.mxu0 0.0
    %561 = vmatpush1.msra.mxu0 0.0
    %562 = vmatprep.mubr.f32.mxu0 0.0
    %563 = vmatmul.mubr.f32.gmra.mrb[0].mxu0 %v496
    %v564 = vpop.f32.mrb[0].mxu0
    %v565 = vadd.f32 %v493, %v564
    %v566 = vpop.f32.mrb[0].mxu0
    %567 = vdwg.mxu0
    %568 = vst [vmem:[#allocation2] sm:$0x1f] %v565
    // Predicated region
    $region38: #{tpu_custom_call.1} parent=1 // pred_check
      _
    $region39: #{tpu_custom_call.1} parent=1 // pred_check_branch
      %570 = sbr.rel (0) target = $region41
    $region40: #{tpu_custom_call.1} parent=1 // pred_region
      %s572 = ssub.s32 128, 128
      %573 = vsyncadd [#allocation3], %s572
      %s575 = sshll.u32 [#allocation2], 4
      %s576 = int_to_ptr.vmem [resolvable:$true] %s575
      %578 = dma.vmem_to_hbm [thread:$0]  %s576, 128, %s9, [#allocation3]
    $region41: #{tpu_custom_call.1} parent=1 // pred_fallthru
      _
    // Predicated region
    $region42: #{tpu_custom_call.1} parent=1 // pred_check
      _
    $region43: #{tpu_custom_call.1} parent=1 // pred_check_branch
      %580 = sbr.rel (0) target = $region45
    $region44: #{tpu_custom_call.1} parent=1 // pred_region
      %581 = dma.done [#allocation3], 128
    $region45: #{tpu_custom_call.1} parent=1 // pred_fallthru
      _
    %582 = vsyncpa [#allocation3], 1

</llo_original>
